<compile_context>
chip_gen: v5e
topology: v5e:2x2
jax: 0.10.0
libtpu: 0.0.40
codegen_flags: <defaults>
</compile_context>

<pallas_src>
import jax
import jax.numpy as jnp
from jax.experimental import pallas as pl
from jax.experimental.pallas import tpu as pltpu

_SUB = 256                  # sub-block edge for in-tile transposes
_SMALL_PLANE_BYTES = 512 << 10
_BATCH_BLOCK_BYTES = 2 << 20
_VMEM_LIMIT = 48 << 20      # fits 1024^2 f32 in/out double-buffered + scratch,
                            # with headroom on v7x's 64 MiB physical VMEM.


def _make_tile_kernel(ts: int, tc: int):
    """Kernel for one (ts, tc) -> (tc, ts) tile, transposed in sub-blocks."""

    def kernel(x_ref, o_ref):
        # x_ref: (ts, tc) VMEM tile; o_ref: (tc, ts) VMEM tile.
        # <=256x256 granules keep vreg live ranges small and let the XLU
        # transposes overlap the tile DMAs instead of one monolithic relayout.
        for i0 in range(0, ts, _SUB):
            si = min(_SUB, ts - i0)
            for j0 in range(0, tc, _SUB):
                sj = min(_SUB, tc - j0)
                o_ref[j0:j0 + sj, i0:i0 + si] = x_ref[i0:i0 + si, j0:j0 + sj].T

    return kernel


def _batched_kernel(x_ref, o_ref):
    # x_ref: (Bb, S, C); o_ref: (Bb, C, S) — several whole small planes/step.
    o_ref[...] = jnp.swapaxes(x_ref[...], 1, 2)


def _default_tile() -> int:
    # v5e: 512 tiles already sit at its ~0.8 TB/s roofline and its default
    # scoped VMEM is smallest; v6e/v7x: 1024 halves grid steps and lengthens
    # DMA segments (do not go to 2048 — that would blow v7x's 64 MiB VMEM).
    try:
        kind = jax.devices()[0].device_kind.lower()
    except Exception:
        return 1024
    if "v5 lite" in kind or "v5lite" in kind or "v5e" in kind:
        return 512
    return 1024


def trans(x: jax.Array, *, tile_s: int | None = None, tile_c: int | None = None) -> jax.Array:
    """Pallas equivalent of Trans.forward: x.permute(0, 2, 1) for x of shape (B, S, C)."""
    B, S, C = x.shape
    itemsize = jnp.dtype(x.dtype).itemsize
    cost = pl.CostEstimate(
        flops=0,
        transcendentals=0,
        bytes_accessed=2 * B * S * C * itemsize,
    )

    plane_bytes = S * C * itemsize
    if plane_bytes <= _SMALL_PLANE_BYTES:
        # --- Small-plane path: block batches together, keep whole planes. ---
        bb = max(1, min(B, _BATCH_BLOCK_BYTES // max(plane_bytes, 1)))
        grid = (pl.cdiv(B, bb),)
        return pl.pallas_call(
            _batched_kernel,
            out_shape=jax.ShapeDtypeStruct((B, C, S), x.dtype),
            grid_spec=pltpu.PrefetchScalarGridSpec(
                num_scalar_prefetch=0,
                grid=grid,
                in_specs=[pl.BlockSpec((bb, S, C), lambda b: (b, 0, 0))],
                out_specs=pl.BlockSpec((bb, C, S), lambda b: (b, 0, 0)),
            ),
            compiler_params=pltpu.CompilerParams(
                dimension_semantics=("parallel",),
                vmem_limit_bytes=_VMEM_LIMIT,
            ),
            cost_estimate=cost,
        )(x)

    # --- Tiled path: tile the (S, C) plane, squeeze batch out of the block. ---
    pref = _default_tile()
    ts = tile_s if tile_s is not None else (S if S <= pref else pref)
    tc = tile_c if tile_c is not None else (C if C <= pref else pref)
    gs, gc = pl.cdiv(S, ts), pl.cdiv(C, tc)

    # Widest parallel tile axis first (v7x megacore sharding even at B==1),
    # batch last.
    if gs >= gc:
        grid = (gs, gc, B)
        in_map = lambda i, j, b: (b, i, j)
        out_map = lambda i, j, b: (b, j, i)
    else:
        grid = (gc, gs, B)
        in_map = lambda j, i, b: (b, i, j)
        out_map = lambda j, i, b: (b, j, i)

    # NOTE: default double-buffering; if an xprof trace shows exposed DMA at
    # steady state (most likely on v7x), add pipeline_mode=pl.Buffered(3) to
    # the input BlockSpec.
    return pl.pallas_call(
        _make_tile_kernel(ts, tc),
        out_shape=jax.ShapeDtypeStruct((B, C, S), x.dtype),
        grid_spec=pltpu.PrefetchScalarGridSpec(
            num_scalar_prefetch=0,
            grid=grid,
            in_specs=[pl.BlockSpec((pl.Squeezed(), ts, tc), in_map)],
            out_specs=pl.BlockSpec((pl.Squeezed(), tc, ts), out_map),
        ),
        compiler_params=pltpu.CompilerParams(
            dimension_semantics=("parallel", "parallel", "parallel"),
            vmem_limit_bytes=_VMEM_LIMIT,
        ),
        cost_estimate=cost,
    )(x)


if __name__ == "__main__":
    key0, key1, key2 = jax.random.split(jax.random.PRNGKey(0), 3)

    # 1) Small shape consistent with the module's (batch, seq, hidden) input.
    #    Exercises the batched small-plane path (no squeezed batch).
    B, S, C = 2, 8, 32
    x_small = jax.random.normal(key0, (B, S, C), dtype=jnp.float32)
    y_small = jax.block_until_ready(trans(x_small))
    ref_small = jnp.transpose(x_small, (0, 2, 1))
    assert y_small.shape == (B, C, S)
    assert jnp.array_equal(y_small, ref_small)

    # 2) Modest shape exercising the tiled path (full-extent blocks, sub-block
    #    tails along S inside the kernel).
    B2, S2, C2 = 1, 640, 256
    x_big = jax.random.normal(key1, (B2, S2, C2), dtype=jnp.float32)
    y_big = jax.block_until_ready(trans(x_big))
    ref_big = jnp.transpose(x_big, (0, 2, 1))
    assert y_big.shape == (B2, C2, S2)
    assert jnp.array_equal(y_big, ref_big)

    # 3) Tiled path with batch > 1 (squeezed batch as the trailing grid axis)
    #    and sub-block tails on both tile axes.
    B3, S3, C3 = 2, 384, 640
    x_mid = jax.random.normal(key2, (B3, S3, C3), dtype=jnp.float32)
    y_mid = jax.block_until_ready(trans(x_mid))
    ref_mid = jnp.transpose(x_mid, (0, 2, 1))
    assert y_mid.shape == (B3, C3, S3)
    assert jnp.array_equal(y_mid, ref_mid)

    print("KERNEL_OK")
</pallas_src>

<mosaic_0001>
module attributes {stable_mosaic.version = 11 : i64} {
  func.func @_batched_kernel(%arg0: i32, %arg1: memref<2x8x32xf32, #tpu.memory_space<vmem>>, %arg2: memref<2x32x8xf32, #tpu.memory_space<vmem>>) attributes {dimension_semantics = [#tpu.dimension_semantics<parallel>], iteration_bounds = array<i64: 1>, scalar_prefetch = 0 : i64, scratch_operands = 0 : i64, tpu.core_type = #tpu.core_type<tc>, window_params = [{transform_indices = @transform_0, window_bounds = array<i64: 2, 8, 32>}, {transform_indices = @transform_1, window_bounds = array<i64: 2, 32, 8>}]} {
    %c0 = arith.constant 0 : index
    %c0_0 = arith.constant 0 : index
    %c0_1 = arith.constant 0 : index
    %0 = vector.load %arg1[%c0, %c0_0, %c0_1] : memref<2x8x32xf32, #tpu.memory_space<vmem>>, vector<2x8x32xf32>
    %1 = tpu.transpose %0, [0, 2, 1] : vector<2x8x32xf32> -> vector<2x32x8xf32>
    %c0_2 = arith.constant 0 : index
    %c0_3 = arith.constant 0 : index
    %c0_4 = arith.constant 0 : index
    %2 = vector.load %arg2[%c0_2, %c0_3, %c0_4] : memref<2x32x8xf32, #tpu.memory_space<vmem>>, vector<2x32x8xf32>
    tpu.vector_store %arg2[%c0_2, %c0_3, %c0_4], %1 {strides = array<i32>} : memref<2x32x8xf32, #tpu.memory_space<vmem>>, vector<2x32x8xf32>,
    return
  }
  func.func @transform_0(%arg0: i32) -> (i32, i32, i32) {
    %c0_i32 = arith.constant 0 : i32
    %c0_i32_0 = arith.constant 0 : i32
    %c0_i32_1 = arith.constant 0 : i32
    return %arg0, %c0_i32, %c0_i32_0 : i32, i32, i32
  }
  func.func @transform_1(%arg0: i32) -> (i32, i32, i32) {
    %c0_i32 = arith.constant 0 : i32
    %c0_i32_0 = arith.constant 0 : i32
    %c0_i32_1 = arith.constant 0 : i32
    return %arg0, %c0_i32, %c0_i32_0 : i32, i32, i32
  }
}

</mosaic_0001>

<llo_original>
// kernel: tpu_custom_call.1
$region0: #{tpu_custom_call.1}
  #allocation0 [shape = 'u32[]', space=smem, size = 0x4, offset = 0x4, fixed_abs, tag = 'smem constant byte address 0x4 - core index']
  #allocation1 [shape = 'u32[72,128]{1,0:T(1,128)}', space=vmem, size = 0x9000, scoped, tag = 'internal scratch']
  %s0 = inlined_call_operand.hbm [shape: f32[2,8,32], index: 0, kind: input, shape index: {}]
  %s1 = inlined_call_operand.vmem [shape: f32[2,32,8], index: 1, kind: output, shape index: {}]
  %s2 = sld [smem:[#allocation0]]
  $region18: #{tpu_custom_call.1} parent=0
    _
  %s4 = ssub.s32 1, %s2
  %s5 = scalar_select 0, %s4, %s2
  $region1: #{tpu_custom_call.1} parent=0
    #allocation2 [shape = 'u8[8192]{0}', space=vmem, size = 0x2000, scoped, tag = 'input window, operand 0, single buffered']
    #allocation3 [shape = 's32[1]{0}', space=sflag, size = 0x4, scoped, tag = 'scoped memory for tpu_custom_call.1']
    %6 = vsyncpa [#allocation3], 0
    // Predicated region
    $region2: #{tpu_custom_call.1} parent=1 // pred_check
      _
    $region3: #{tpu_custom_call.1} parent=1 // pred_check_branch
      %8 = sbr.rel (0) target = $region5
    $region4: #{tpu_custom_call.1} parent=1 // pred_region
      %10 = vsyncadd [#allocation3], 0
      %s11 = sshll.u32 %s0, 4
      %s12 = int_to_ptr.hbm [resolvable:$true] %s11
      %s13 = sshll.u32 [#allocation2], 4
      %s14 = int_to_ptr.vmem [resolvable:$true] %s13
      %19 = dma.hbm_to_vmem [thread:$0]  %s12, 256, %s14, [#allocation3], 128, 128, 8
    $region5: #{tpu_custom_call.1} parent=1 // pred_fallthru
      _
    // Predicated region
    $region6: #{tpu_custom_call.1} parent=1 // pred_check
      _
    $region7: #{tpu_custom_call.1} parent=1 // pred_check_branch
      %21 = sbr.rel (0) target = $region9
    $region8: #{tpu_custom_call.1} parent=1 // pred_region
      %23 = dma.done [#allocation3], 256
    $region9: #{tpu_custom_call.1} parent=1 // pred_fallthru
      _
    %v24 = vld [vmem:[#allocation2] sm:$0xff]
    %v25 = vld [vmem:[#allocation2 + $0x8] sm:$0xff]
    %26 = vxpose.xlu0.b32.start [1/16] %v24, 128
    %27 = vxpose.xlu0.b32.cont [2/16] 0.0, 128
    %28 = vxpose.xlu0.b32.cont [3/16] 0.0, 128
    %29 = vxpose.xlu0.b32.cont [4/16] 0.0, 128
    %30 = vxpose.xlu0.b32.cont [5/16] 0.0, 128
    %31 = vxpose.xlu0.b32.cont [6/16] 0.0, 128
    %32 = vxpose.xlu0.b32.cont [7/16] 0.0, 128
    %33 = vxpose.xlu0.b32.cont [8/16] 0.0, 128
    %34 = vxpose.xlu0.b32.cont [9/16] 0.0, 128
    %35 = vxpose.xlu0.b32.cont [10/16] 0.0, 128
    %36 = vxpose.xlu0.b32.cont [11/16] 0.0, 128
    %37 = vxpose.xlu0.b32.cont [12/16] 0.0, 128
    %38 = vxpose.xlu0.b32.cont [13/16] 0.0, 128
    %39 = vxpose.xlu0.b32.cont [14/16] 0.0, 128
    %40 = vxpose.xlu0.b32.cont [15/16] 0.0, 128
    %41 = vxpose.xlu0.b32.end [16/16] 0.0, 128
    %v42 = vpop.trf.xlu0
    %v43 = vpop.trf.xlu0
    %v44 = vpop.trf.xlu0
    %v45 = vpop.trf.xlu0
    %v46 = vpop.trf.xlu0
    %v47 = vpop.trf.xlu0
    %v48 = vpop.trf.xlu0
    %v49 = vpop.trf.xlu0
    %v50 = vpop.trf.xlu0
    %v51 = vpop.trf.xlu0
    %v52 = vpop.trf.xlu0
    %v53 = vpop.trf.xlu0
    %v54 = vpop.trf.xlu0
    %v55 = vpop.trf.xlu0
    %v56 = vpop.trf.xlu0
    %v57 = vpop.trf.xlu0
    %58 = vxpose.xlu0.b32.start [1/16] %v25, 128
    %59 = vxpose.xlu0.b32.cont [2/16] 0.0, 128
    %60 = vxpose.xlu0.b32.cont [3/16] 0.0, 128
    %61 = vxpose.xlu0.b32.cont [4/16] 0.0, 128
    %62 = vxpose.xlu0.b32.cont [5/16] 0.0, 128
    %63 = vxpose.xlu0.b32.cont [6/16] 0.0, 128
    %64 = vxpose.xlu0.b32.cont [7/16] 0.0, 128
    %65 = vxpose.xlu0.b32.cont [8/16] 0.0, 128
    %66 = vxpose.xlu0.b32.cont [9/16] 0.0, 128
    %67 = vxpose.xlu0.b32.cont [10/16] 0.0, 128
    %68 = vxpose.xlu0.b32.cont [11/16] 0.0, 128
    %69 = vxpose.xlu0.b32.cont [12/16] 0.0, 128
    %70 = vxpose.xlu0.b32.cont [13/16] 0.0, 128
    %71 = vxpose.xlu0.b32.cont [14/16] 0.0, 128
    %72 = vxpose.xlu0.b32.cont [15/16] 0.0, 128
    %73 = vxpose.xlu0.b32.end [16/16] 0.0, 128
    %v74 = vpop.trf.xlu0
    %v75 = vpop.trf.xlu0
    %v76 = vpop.trf.xlu0
    %v77 = vpop.trf.xlu0
    %v78 = vpop.trf.xlu0
    %v79 = vpop.trf.xlu0
    %v80 = vpop.trf.xlu0
    %v81 = vpop.trf.xlu0
    %v82 = vpop.trf.xlu0
    %v83 = vpop.trf.xlu0
    %v84 = vpop.trf.xlu0
    %v85 = vpop.trf.xlu0
    %v86 = vpop.trf.xlu0
    %v87 = vpop.trf.xlu0
    %v88 = vpop.trf.xlu0
    %v89 = vpop.trf.xlu0
    %vm90 = vcmask 64512
    %91 = vst.msk [vmem:[%s1] sm:$0xff] %vm90, %v42
    %92 = vst.msk [vmem:[%s1 + $0x8] sm:$0xff] %vm90, %v43
    %93 = vst.msk [vmem:[%s1 + $0x10] sm:$0xff] %vm90, %v44
    %94 = vst.msk [vmem:[%s1 + $0x18] sm:$0xff] %vm90, %v45
    %95 = vst.msk [vmem:[%s1 + $0x20] sm:$0xff] %vm90, %v74
    %96 = vst.msk [vmem:[%s1 + $0x28] sm:$0xff] %vm90, %v75
    %97 = vst.msk [vmem:[%s1 + $0x30] sm:$0xff] %vm90, %v76
    %98 = vst.msk [vmem:[%s1 + $0x38] sm:$0xff] %vm90, %v77
    // Predicated region
    $region10: #{tpu_custom_call.1} parent=1 // pred_check
      _
    $region11: #{tpu_custom_call.1} parent=1 // pred_check_branch
      %100 = sbr.rel (0) target = $region13
    $region12: #{tpu_custom_call.1} parent=1 // pred_region
      _
    $region13: #{tpu_custom_call.1} parent=1 // pred_fallthru
      _
    // Predicated region
    $region14: #{tpu_custom_call.1} parent=1 // pred_check
      _
    $region15: #{tpu_custom_call.1} parent=1 // pred_check_branch
      %102 = sbr.rel (0) target = $region17
    $region16: #{tpu_custom_call.1} parent=1 // pred_region
      _
    $region17: #{tpu_custom_call.1} parent=1 // pred_fallthru
      _
    %103 = vsyncpa [#allocation3], 1

</llo_original>
